<compile_context>
chip_gen: v5e
topology: v5e:2x2
jax: 0.10.0
libtpu: 0.0.40
codegen_flags: <defaults>
</compile_context>

<pallas_src>
import jax
import jax.numpy as jnp
from jax.experimental import pallas as pl
from jax.experimental.pallas import tpu as pltpu


def _rowdot_kernel(gut_ref, git_ref, out_ref):
    # out[0, 0, b] = sum_k gut[b, k] * git[b, k], accumulated in f32.
    gu = gut_ref[...].astype(jnp.float32)
    gi = git_ref[...].astype(jnp.float32)
    s = jnp.sum(gu * gi, axis=1)           # (tb,)  VPU multiply + XLU lane reduce
    out_ref[...] = s.reshape(1, 1, -1)     # lane-dense (1, 1, tb) store


def _pick_batch_tile(B, K, itemsize, vmem_budget_bytes=8 * 1024 * 1024):
    """Largest batch tile whose 2 inputs x 2 pipeline buffers fit the VMEM budget."""
    if B <= 8:
        return B                          # single block == full array (always legal)
    budget_rows = max(8, vmem_budget_bytes // (4 * K * itemsize))
    tb = min(B, budget_rows)
    if B >= 256:
        # Keep at least 2 grid steps so the batch axis can shard across the
        # two TensorCores on v7x (harmless on v5e / v6e).
        tb = min(tb, pl.cdiv(B, 2))
    if tb >= 128:
        tb = (tb // 128) * 128            # lane-dense output slabs
    else:
        tb = (tb // 8) * 8                # sublane alignment
    return max(tb, 8)


def egcfv2_forward(gut, git):
    """Pallas implementation of EGCFv2Model.forward((gut, git)) -> xui, shape (B,)."""
    if gut.ndim != 2:
        gut = jnp.squeeze(gut)
    if git.ndim != 2:
        git = jnp.squeeze(git)
    assert gut.shape == git.shape and gut.ndim == 2
    B, K = gut.shape

    itemsize = max(jnp.dtype(gut.dtype).itemsize, jnp.dtype(git.dtype).itemsize)
    tb = _pick_batch_tile(B, K, itemsize)
    nb = pl.cdiv(B, tb)

    bytes_in = 2 * B * K * itemsize
    out = pl.pallas_call(
        _rowdot_kernel,
        out_shape=jax.ShapeDtypeStruct((nb, 1, tb), jnp.float32),
        grid=(nb,),
        in_specs=[
            pl.BlockSpec((tb, K), lambda i: (i, 0)),
            pl.BlockSpec((tb, K), lambda i: (i, 0)),
        ],
        out_specs=pl.BlockSpec((1, 1, tb), lambda i: (i, 0, 0)),
        compiler_params=pltpu.CompilerParams(
            dimension_semantics=("parallel",),
            vmem_limit_bytes=32 * 1024 * 1024,
        ),
        cost_estimate=pl.CostEstimate(
            flops=2 * B * K,
            transcendentals=0,
            bytes_accessed=bytes_in + B * 4,
        ),
    )(gut, git)
    return out.reshape(nb * tb)[:B]


def xavier_normal(key, shape):
    fan_in, fan_out = shape[0], shape[1]
    std = (2.0 / (fan_in + fan_out)) ** 0.5
    return std * jax.random.normal(key, shape, dtype=jnp.float32)


if __name__ == "__main__":
    # Small, deterministic synthetic setup consistent with the module's __init__.
    num_users, num_items, embed_k = 48, 64, 32
    batch = 37            # deliberately not a multiple of 8: exercises cdiv + partial tile

    key = jax.random.PRNGKey(0)
    k_gut, k_git, k_u, k_i = jax.random.split(key, 4)

    # Parameters (shapes from __init__): Gut (num_users, embed_k), Git (num_items, embed_k).
    Gut = xavier_normal(k_gut, (num_users, embed_k))
    Git = xavier_normal(k_git, (num_items, embed_k))
    # TODO(synk): propagate_embeddings (n_layers of NodeNodeTextLayer message passing
    # over node_node_adj with edge features) is upstream of forward() and has no clean
    # single-kernel Pallas equivalent here; the raw embedding tables stand in for it.

    # Batch of user / item indices; gather in plain JAX, as train_step does with
    # gut[user[:, 0]], git[pos[:, 0]] (rows are too small for efficient fused DMA gather).
    user_idx = jax.random.randint(k_u, (batch,), 0, num_users)
    item_idx = jax.random.randint(k_i, (batch,), 0, num_items)
    gut = Gut[user_idx]   # (B, K)
    git = Git[item_idx]   # (B, K)

    # f32 path (matches the torch module's parameter dtype).
    xui = jax.block_until_ready(egcfv2_forward(gut, git))
    ref = jnp.sum(gut * git, axis=1)
    assert xui.shape == (batch,)
    assert jnp.allclose(xui, ref, atol=1e-5, rtol=1e-5)

    # bf16 streaming path (halved HBM read traffic, f32 accumulation in-kernel).
    gut_bf16 = gut.astype(jnp.bfloat16)
    git_bf16 = git.astype(jnp.bfloat16)
    xui_bf16 = jax.block_until_ready(egcfv2_forward(gut_bf16, git_bf16))
    ref_bf16 = jnp.sum(gut_bf16.astype(jnp.float32) * git_bf16.astype(jnp.float32), axis=1)
    assert xui_bf16.shape == (batch,)
    assert jnp.allclose(xui_bf16, ref_bf16, atol=1e-4, rtol=1e-4)

    # Multi-tile, lane-dense (tb = 128) path with a partial edge tile: B=260, K=128.
    k_a, k_b = jax.random.split(jax.random.PRNGKey(1))
    ga = jax.random.normal(k_a, (260, 128), dtype=jnp.float32)
    gb = jax.random.normal(k_b, (260, 128), dtype=jnp.float32)
    x_big = jax.block_until_ready(egcfv2_forward(ga, gb))
    ref_big = jnp.sum(ga * gb, axis=1)
    assert x_big.shape == (260,)
    assert jnp.allclose(x_big, ref_big, atol=1e-4, rtol=1e-4)

    print("KERNEL_OK")
</pallas_src>

<mosaic_0001>
module attributes {stable_mosaic.version = 11 : i64} {
  func.func @_rowdot_kernel(%arg0: i32, %arg1: memref<32x32xf32, #tpu.memory_space<vmem>>, %arg2: memref<32x32xf32, #tpu.memory_space<vmem>>, %arg3: memref<1x1x32xf32, #tpu.memory_space<vmem>>) attributes {dimension_semantics = [#tpu.dimension_semantics<parallel>], iteration_bounds = array<i64: 2>, scalar_prefetch = 0 : i64, scratch_operands = 0 : i64, tpu.core_type = #tpu.core_type<tc>, window_params = [{transform_indices = @transform_0, window_bounds = array<i64: 32, 32>}, {transform_indices = @transform_1, window_bounds = array<i64: 32, 32>}, {transform_indices = @transform_2, window_bounds = array<i64: 1, 1, 32>}]} {
    %c0 = arith.constant 0 : index
    %c0_0 = arith.constant 0 : index
    %0 = vector.load %arg1[%c0, %c0_0] : memref<32x32xf32, #tpu.memory_space<vmem>>, vector<32x32xf32>
    %c0_1 = arith.constant 0 : index
    %c0_2 = arith.constant 0 : index
    %1 = vector.load %arg2[%c0_1, %c0_2] : memref<32x32xf32, #tpu.memory_space<vmem>>, vector<32x32xf32>
    %2 = arith.mulf %0, %1 : vector<32x32xf32>
    %cst = arith.constant dense<0.000000e+00> : vector<32xf32>
    %3 = vector.multi_reduction <add>, %2, %cst [1] : vector<32x32xf32> to vector<32xf32>
    %4 = vector.shape_cast %3 : vector<32xf32> to vector<1x1x32xf32>
    %c0_3 = arith.constant 0 : index
    %c0_4 = arith.constant 0 : index
    %c0_5 = arith.constant 0 : index
    %5 = vector.load %arg3[%c0_3, %c0_4, %c0_5] : memref<1x1x32xf32, #tpu.memory_space<vmem>>, vector<1x1x32xf32>
    tpu.vector_store %arg3[%c0_3, %c0_4, %c0_5], %4 {strides = array<i32>} : memref<1x1x32xf32, #tpu.memory_space<vmem>>, vector<1x1x32xf32>,
    return
  }
  func.func @transform_0(%arg0: i32) -> (i32, i32) {
    %c0_i32 = arith.constant 0 : i32
    %c0_i32_0 = arith.constant 0 : i32
    return %arg0, %c0_i32 : i32, i32
  }
  func.func @transform_1(%arg0: i32) -> (i32, i32) {
    %c0_i32 = arith.constant 0 : i32
    %c0_i32_0 = arith.constant 0 : i32
    return %arg0, %c0_i32 : i32, i32
  }
  func.func @transform_2(%arg0: i32) -> (i32, i32, i32) {
    %c0_i32 = arith.constant 0 : i32
    %c0_i32_0 = arith.constant 0 : i32
    %c0_i32_1 = arith.constant 0 : i32
    return %arg0, %c0_i32, %c0_i32_0 : i32, i32, i32
  }
}

</mosaic_0001>

<llo_original>
// kernel: tpu_custom_call.1
$region0: #{tpu_custom_call.1}
  #allocation0 [shape = 'u32[]', space=smem, size = 0x4, offset = 0x4, fixed_abs, tag = 'smem constant byte address 0x4 - core index']
  #allocation1 [shape = 'u32[72,128]{1,0:T(1,128)}', space=vmem, size = 0x9000, scoped, tag = 'internal scratch']
  %s0 = inlined_call_operand.vmem [shape: f32[37,32], index: 0, kind: input, shape index: {}]
  %s1 = inlined_call_operand.vmem [shape: f32[37,32], index: 1, kind: input, shape index: {}]
  %s2 = inlined_call_operand.hbm [shape: f32[2,1,32], index: 2, kind: output, shape index: {}]
  %s3 = sld [smem:[#allocation0]]
  $region41: #{tpu_custom_call.1} parent=0
    _
  %s5 = ssub.s32 1, %s3
  %s6 = scalar_select 0, %s5, %s3
  $region1: #{tpu_custom_call.1} parent=0
    #allocation2 [shape = 'u8[1024]{0}', space=vmem, size = 0x400, scoped, tag = 'output window, operand 0']
    #allocation3 [shape = 's32[2]{0}', space=sflag, size = 0x8, scoped, tag = 'scoped memory for tpu_custom_call.1']
    %7 = vsyncpa [#allocation3], 0
    %s8 = scalar_lea.sflag [#allocation3], 1
    %9 = vsyncpa %s8, 0
    loop: start=0, step=1, limit=4
    $region2: #{tpu_custom_call.1} parent=1 // loop_pre_header
      _
    $region3: #{tpu_custom_call.1} parent=1 // loop_header
      %s11 = sphi 0, %s15
      %p12 = scmp.ge.s32.totalorder %s11, 4
      %s21 = sphi 0, %s23
      %s24 = sphi 0, %s21
      %s25 = sphi 0, %s24
      %s41 = sphi 0, %s25
      %s47 = sphi 0, %s49
      %s50 = sphi 0, %s47
      %s51 = sphi 0, %s50
      %s67 = sphi 0, %s51
      %s73 = sphi 0, %s75
      %s76 = sphi 0, %s73
      %s77 = sphi 0, %s76
      %s93 = sphi 0, %s77
    $region4: #{tpu_custom_call.1} parent=1 // loop_header_branch
      %14 = sbr.rel (%p12) target = $region8
    $region5: #{tpu_custom_call.1} parent=1 // loop_body
      %s16 = ssub.s32 %s11, 1
      %s17 = ssub.s32 %s11, 2
      %s18 = sadd.s32 %s11, 1
      %s19 = ssub.s32 %s11, %s18
      %p20 = scmp.eq.s32.totalorder %s19, 0
      %s22 = sadd.s32 %s21, 1
      %s23 = scalar_select %p20, %s21, %s22
      %p26 = pneg %p20
      %p27 = scmp.eq.s32.totalorder %s11, 1
      %p28 = por %p26, %p27
      %p29 = scmp.ne.s32.totalorder %s21, %s24
      %p30 = scmp.eq.s32.totalorder %s11, 0
      %p31 = por %p29, %p30
      %p32 = scmp.ne.s32.totalorder %s21, %s24
      %p33 = scmp.eq.s32.totalorder %s16, 1
      %p34 = por %p32, %p33
      %p35 = scmp.ne.s32.totalorder %s24, %s25
      %p36 = scmp.eq.s32.totalorder %s16, 0
      %p37 = por %p35, %p36
      %p38 = scmp.ne.s32.totalorder %s24, %s25
      %p39 = scmp.eq.s32.totalorder %s17, 1
      %p40 = por %p38, %p39
      %p42 = scmp.ne.s32.totalorder %s25, %s41
      %p43 = scmp.eq.s32.totalorder %s17, 0
      %p44 = por %p42, %p43
      %s45 = ssub.s32 %s11, %s18
      %p46 = scmp.eq.s32.totalorder %s45, 0
      %s48 = sadd.s32 %s47, 1
      %s49 = scalar_select %p46, %s47, %s48
      %p52 = pneg %p46
      %p53 = scmp.eq.s32.totalorder %s11, 1
      %p54 = por %p52, %p53
      %p55 = scmp.ne.s32.totalorder %s47, %s50
      %p56 = scmp.eq.s32.totalorder %s11, 0
      %p57 = por %p55, %p56
      %p58 = scmp.ne.s32.totalorder %s47, %s50
      %p59 = scmp.eq.s32.totalorder %s16, 1
      %p60 = por %p58, %p59
      %p61 = scmp.ne.s32.totalorder %s50, %s51
      %p62 = scmp.eq.s32.totalorder %s16, 0
      %p63 = por %p61, %p62
      %p64 = scmp.ne.s32.totalorder %s50, %s51
      %p65 = scmp.eq.s32.totalorder %s17, 1
      %p66 = por %p64, %p65
      %p68 = scmp.ne.s32.totalorder %s51, %s67
      %p69 = scmp.eq.s32.totalorder %s17, 0
      %p70 = por %p68, %p69
      %s71 = ssub.s32 %s11, %s18
      %p72 = scmp.eq.s32.totalorder %s71, 0
      %s74 = sadd.s32 %s73, 1
      %s75 = scalar_select %p72, %s73, %s74
      %p78 = pneg %p72
      %p79 = scmp.eq.s32.totalorder %s11, 1
      %p80 = por %p78, %p79
      %p81 = scmp.ne.s32.totalorder %s73, %s76
      %p82 = scmp.eq.s32.totalorder %s11, 0
      %p83 = por %p81, %p82
      %p84 = scmp.ne.s32.totalorder %s73, %s76
      %p85 = scmp.eq.s32.totalorder %s16, 1
      %p86 = por %p84, %p85
      %p87 = scmp.ne.s32.totalorder %s76, %s77
      %p88 = scmp.eq.s32.totalorder %s16, 0
      %p89 = por %p87, %p88
      %p90 = scmp.ne.s32.totalorder %s76, %s77
      %p91 = scmp.eq.s32.totalorder %s17, 1
      %p92 = por %p90, %p91
      %p94 = scmp.ne.s32.totalorder %s77, %s93
      %p95 = scmp.eq.s32.totalorder %s17, 0
      %p96 = por %p94, %p95
      %p97 = scmp.le.s32.totalorder 1, %s11
      %p98 = scmp.lt.s32.totalorder %s11, 3
      %p99 = pnand %p97, %p98
      %p100 = pneg %p99
      // Predicated region
      $region9: #{tpu_custom_call.1} parent=5 // pred_check
        _
      $region10: #{tpu_custom_call.1} parent=5 // pred_check_branch
        %102 = sbr.rel (%p99) target = $region12
      $region11: #{tpu_custom_call.1} parent=5 // pred_region
        %s103 = ssub.s32 %s11, 1
      $region12: #{tpu_custom_call.1} parent=5 // pred_fallthru
        _
      %p104 = scmp.lt.s32.totalorder %s11, 2
      // Predicated region
      $region13: #{tpu_custom_call.1} parent=5 // pred_check
        %p105 = pneg %p104
      $region14: #{tpu_custom_call.1} parent=5 // pred_check_branch
        %107 = sbr.rel (%p105) target = $region16
      $region15: #{tpu_custom_call.1} parent=5 // pred_region
        // Predicated region
        $region17: #{tpu_custom_call.1} parent=15 // pred_check
          %p108 = pneg %p31
        $region18: #{tpu_custom_call.1} parent=15 // pred_check_branch
          %110 = sbr.rel (%p108) target = $region20
        $region19: #{tpu_custom_call.1} parent=15 // pred_region
          %s111 = smul.u32 4, %s11
          %s112 = ssub.s32 5, %s111
          %p113 = scmp.lt.s32.totalorder %s112, 4
          %s114 = scalar_select %p113, %s112, 4
          %s115 = smul.u32 8, %s114
          %p116 = scmp.lt.s32.totalorder %s111, 4
          %s117 = scalar_select %p116, %s111, 4
          %s118 = smul.addr %s117, 8
          %s119 = scalar_lea.vmem %s0, %s118
          %s120 = smul.u32 4, %s11
          %s121 = ssub.s32 5, %s120
          %p122 = scmp.lt.s32.totalorder %s121, 4
          %s123 = scalar_select %p122, %s121, 4
          %s124 = smul.u32 8, %s123
        $region20: #{tpu_custom_call.1} parent=15 // pred_fallthru
          _
        // Predicated region
        $region21: #{tpu_custom_call.1} parent=15 // pred_check
          %p125 = pneg %p57
        $region22: #{tpu_custom_call.1} parent=15 // pred_check_branch
          %127 = sbr.rel (%p125) target = $region24
        $region23: #{tpu_custom_call.1} parent=15 // pred_region
          %s128 = smul.u32 4, %s11
          %s129 = ssub.s32 5, %s128
          %p130 = scmp.lt.s32.totalorder %s129, 4
          %s131 = scalar_select %p130, %s129, 4
          %s132 = smul.u32 8, %s131
          %p133 = scmp.lt.s32.totalorder %s128, 4
          %s134 = scalar_select %p133, %s128, 4
          %s135 = smul.addr %s134, 8
          %s136 = scalar_lea.vmem %s1, %s135
          %s137 = smul.u32 4, %s11
          %s138 = ssub.s32 5, %s137
          %p139 = scmp.lt.s32.totalorder %s138, 4
          %s140 = scalar_select %p139, %s138, 4
          %s141 = smul.u32 8, %s140
        $region24: #{tpu_custom_call.1} parent=15 // pred_fallthru
          _
      $region16: #{tpu_custom_call.1} parent=5 // pred_fallthru
        _
      %p142 = scmp.le.s32.totalorder 1, %s11
      %p143 = scmp.lt.s32.totalorder %s11, 3
      %p144 = pnand %p142, %p143
      %p145 = pneg %p144
      // Predicated region
      $region25: #{tpu_custom_call.1} parent=5 // pred_check
        _
      $region26: #{tpu_custom_call.1} parent=5 // pred_check_branch
        %147 = sbr.rel (%p144) target = $region28
      $region27: #{tpu_custom_call.1} parent=5 // pred_region
        %s148 = ssub.s32 %s11, 1
        %s149 = smul.u32 4, %s16
        %s150 = ssub.s32 5, %s149
        %p151 = scmp.lt.s32.totalorder %s150, 4
        %s152 = scalar_select %p151, %s150, 4
        %s153 = smul.u32 8, %s152
        %p154 = scmp.lt.s32.totalorder %s149, 4
        %s155 = scalar_select %p154, %s149, 4
        %s156 = smul.addr %s155, 8
        %s157 = scalar_lea.vmem %s0, %s156
        %p158 = pneg %p37
        %p159 = pneg %p34
        %s160 = smul.u32 4, %s16
        %s161 = ssub.s32 5, %s160
        %p162 = scmp.lt.s32.totalorder %s161, 4
        %s163 = scalar_select %p162, %s161, 4
        %s164 = smul.u32 8, %s163
        %p165 = scmp.lt.s32.totalorder %s160, 4
        %s166 = scalar_select %p165, %s160, 4
        %s167 = smul.addr %s166, 8
        %s168 = scalar_lea.vmem %s1, %s167
        %p169 = pneg %p63
        %p170 = pneg %p60
        %p171 = pneg %p89
        %p172 = pneg %p86
        %s173 = sand.u32 %s76, 1
        %s174 = scalar_lea.sflag [#allocation3], %s173
        %s175 = sand.u32 %s76, 1
        %s176 = scalar_lea.vmem [#allocation2], %s175
        %s177 = smul.u32 4, %s16
        %s178 = ssub.s32 5, %s177
        %p179 = scmp.lt.s32.totalorder %s178, 4
        %s180 = scalar_select %p179, %s178, 4
        %s181 = smul.u32 8, %s180
        %p182 = scmp.lt.s32.totalorder %s177, 4
        %s183 = scalar_select %p182, %s177, 4
        %s184 = smul.addr %s183, 8
        %s185 = scalar_lea.vmem %s0, %s184
        %s186 = smul.u32 4, %s16
        %s187 = ssub.s32 5, %s186
        %p188 = scmp.lt.s32.totalorder %s187, 4
        %s189 = scalar_select %p188, %s187, 4
        %s190 = smul.u32 8, %s189
        %s191 = smul.u32 4, %s16
        %s192 = ssub.s32 5, %s191
        %p193 = scmp.lt.s32.totalorder %s192, 4
        %s194 = scalar_select %p193, %s192, 4
        %s195 = smul.u32 8, %s194
        %p196 = scmp.lt.s32.totalorder %s191, 4
        %s197 = scalar_select %p196, %s191, 4
        %s198 = smul.addr %s197, 8
        %s199 = scalar_lea.vmem %s1, %s198
        %s200 = smul.u32 4, %s16
        %s201 = ssub.s32 5, %s200
        %p202 = scmp.lt.s32.totalorder %s201, 4
        %s203 = scalar_select %p202, %s201, 4
        %s204 = smul.u32 8, %s203
        %v205 = vld [vmem:[%s185] sm:$0xff]
        %v206 = vld [vmem:[%s185 + $0x8] sm:$0xff]
        %v207 = vld [vmem:[%s185 + $0x10] sm:$0xff]
        %v208 = vld [vmem:[%s185 + $0x18] sm:$0xff]
        %v209 = vld [vmem:[%s199] sm:$0xff]
        %v210 = vld [vmem:[%s199 + $0x8] sm:$0xff]
        %v211 = vld [vmem:[%s199 + $0x10] sm:$0xff]
        %v212 = vld [vmem:[%s199 + $0x18] sm:$0xff]
        %v213 = vmul.f32 %v205, %v209
        %v214 = vmul.f32 %v206, %v210
        %v215 = vmul.f32 %v207, %v211
        %v216 = vmul.f32 %v208, %v212
        %vm217 = vcmask 261120
        %v218 = vsel %vm217, %v213, 0.0
        %219 = vadd.xlane.f32.xlu0 %v218
        %v220 = vpop.xlane.xlu0 %219
        %v221 = vsel %vm217, %v214, 0.0
        %222 = vadd.xlane.f32.xlu0 %v221
        %v223 = vpop.xlane.xlu0 %222
        %v224 = vsel %vm217, %v215, 0.0
        %225 = vadd.xlane.f32.xlu0 %v224
        %v226 = vpop.xlane.xlu0 %225
        %v227 = vsel %vm217, %v216, 0.0
        %228 = vadd.xlane.f32.xlu0 %v227
        %v229 = vpop.xlane.xlu0 %228
        %v234 = vlaneseq
        %v235 = vand.u32 %v234, 127
        %v236 = vperm.slane %v220, %v235
        %v237 = vadd.s32 %v235, 4294967288
        %v238 = vperm.slane %v223, %v237
        %vm239 = vcmask 130112
        %v240 = vsel %vm239, %v238, %v236
        %v241 = vadd.s32 %v235, 4294967280
        %v242 = vperm.slane %v226, %v241
        %vm243 = vcmask 195712
        %v244 = vsel %vm243, %v242, %v240
        %v245 = vadd.s32 %v235, 4294967272
        %v246 = vperm.slane %v229, %v245
        %vm247 = vcmask 261312
        %v248 = vsel %vm247, %v246, %v244
        %vm250 = vcmask 253952
        %251 = vst.msk [vmem:[%s176] sm:$0x1] %vm250, %v248
        %s252 = sand.u32 %s76, 1
        %s253 = scalar_lea.sflag [#allocation3], %s252
        %s254 = sand.u32 %s76, 1
        %s255 = scalar_lea.vmem [#allocation2], %s254
        // Predicated region
        $region29: #{tpu_custom_call.1} parent=27 // pred_check
          %p256 = pneg %p86
        $region30: #{tpu_custom_call.1} parent=27 // pred_check_branch
          %258 = sbr.rel (%p256) target = $region32
        $region31: #{tpu_custom_call.1} parent=27 // pred_region
          %260 = vsyncadd %s253, 0
          %s261 = scalar_lea.hbm %s2, %s16
          %s263 = sshll.u32 %s255, 4
          %s264 = int_to_ptr.vmem [resolvable:$true] %s263
          %s265 = sshll.u32 %s261, 4
          %s266 = int_to_ptr.hbm [resolvable:$true] %s265
          %268 = dma.vmem_to_hbm [thread:$0]  %s264, 16, %s266, %s253
        $region32: #{tpu_custom_call.1} parent=27 // pred_fallthru
          _
      $region28: #{tpu_custom_call.1} parent=5 // pred_fallthru
        _
      %p269 = scmp.le.s32.totalorder 2, %s11
      // Predicated region
      $region33: #{tpu_custom_call.1} parent=5 // pred_check
        %p270 = pneg %p269
      $region34: #{tpu_custom_call.1} parent=5 // pred_check_branch
        %272 = sbr.rel (%p270) target = $region36
      $region35: #{tpu_custom_call.1} parent=5 // pred_region
        %s273 = ssub.s32 %s11, 2
        // Predicated region
        $region37: #{tpu_custom_call.1} parent=35 // pred_check
          %p274 = pneg %p92
        $region38: #{tpu_custom_call.1} parent=35 // pred_check_branch
          %276 = sbr.rel (%p274) target = $region40
        $region39: #{tpu_custom_call.1} parent=35 // pred_region
          %s277 = sand.u32 %s77, 1
          %s278 = scalar_lea.sflag [#allocation3], %s277
          %s279 = sand.u32 %s77, 1
          %s280 = scalar_lea.vmem [#allocation2], %s279
          %282 = dma.done %s278, 16
        $region40: #{tpu_custom_call.1} parent=35 // pred_fallthru
          _
      $region36: #{tpu_custom_call.1} parent=5 // pred_fallthru
        _
    $region6: #{tpu_custom_call.1} parent=1 // loop_footer
      %s15 = sadd.s32 1, %s11
    $region7: #{tpu_custom_call.1} parent=1 // loop_footer_branch
      %10 = sbr.rel target = $region3
    $region8: #{tpu_custom_call.1} parent=1 // loop_exit
      _
    %283 = vsyncpa [#allocation3], 1
    %s284 = scalar_lea.sflag [#allocation3], 1
    %285 = vsyncpa %s284, 1

</llo_original>
